<compile_context>
chip_gen: v6e
topology: v6e:2x2x1
jax: 0.10.0
libtpu: 0.0.40
codegen_flags: <defaults>
</compile_context>

<pallas_src>
import functools

import jax
import jax.numpy as jnp
from jax.experimental import pallas as pl
from jax.experimental.pallas import tpu as pltpu


def _matmul_relu_kernel(p_ref, w_ref, o_ref):
    """One (batch, spatial-tile) grid step.

    p_ref: (K_pad, TILE)  bf16 im2col patches (row 9*Cin is all-ones -> bias)
    w_ref: (Cout, K_pad)  bf16 folded conv taps + bias column (+ zero pad)
    o_ref: (Cout, TILE)   out_dtype, NCHW-flattened (lane-dense stores)
    """
    acc = jnp.dot(w_ref[...], p_ref[...], preferred_element_type=jnp.float32)
    o_ref[...] = jnp.maximum(acc, 0.0).astype(o_ref.dtype)


def _pick_tile_lanes(hw, cout, out_itemsize, max_block_bytes):
    """Tile width (in 128-lane groups) along the flattened H*W axis.

    Prefers the largest exact divisor of the (lane-rounded) spatial extent
    under the per-block byte budget that still leaves >= 2 grid steps (keeps
    both v7x TCs fed, no tail waste).  Falls back to a single full-width block
    if it fits, else to a cdiv grid with a zero-padded tail — never exceeding
    the budget (hardens the old whole-image fallback)."""
    lanes = pl.cdiv(hw, 128)
    budget = max(1, max_block_bytes // (cout * out_itemsize * 128))
    best = 0
    for d in range(1, min(lanes, budget) + 1):
        if lanes % d == 0 and lanes // d >= 2:
            best = d
    if best * 2 >= min(lanes, budget):   # divisor reasonably close to budget
        return best
    if lanes <= budget:                  # whole (padded) extent in one block
        return lanes
    return budget                        # cdiv grid + zero-padded tail


def _plan(x_shape, cout, out_itemsize):
    """Static planning: (tile width in lanes, vmem_limit_bytes)."""
    _, _, h, w = x_shape
    try:
        info = pltpu.get_tpu_info()
        vmem = int(getattr(info, "vmem_capacity_bytes", 64 * 1024 * 1024))
    except Exception:  # pragma: no cover - conservative (v7x-class) fallback
        vmem = 64 * 1024 * 1024
    big_vmem = vmem >= 100 * 1024 * 1024          # v5e / v6e: 128 MiB VMEM
    max_block_bytes = (12 if big_vmem else 4) * 1024 * 1024
    vmem_limit = (64 if big_vmem else 32) * 1024 * 1024
    tile_lanes = _pick_tile_lanes(h * w, cout, out_itemsize, max_block_bytes)
    return tile_lanes, vmem_limit


@functools.partial(jax.jit, static_argnums=(3, 4, 5))
def _conv3x3_bias_relu_impl(x, weight, bias, tile_lanes, vmem_limit, out_dtype):
    n, cin, h, w = x.shape
    cout = weight.shape[0]
    hw = h * w
    k = 9 * cin + 1                        # conv taps + bias (ones) row
    k_pad = max(32, -(-k // 16) * 16)      # bf16 sublane packing: mult. of 16
    tile = tile_lanes * 128
    n_l = pl.cdiv(hw, tile)
    hw_pad = n_l * tile

    # ---- wrapper-side im2col (fused under jit; ~2.4 MB/img of extra bf16
    # traffic at 224x224 vs the 12.8 MB/img f32 output it unblocks) ---------
    x_pad = jnp.pad(x.astype(jnp.bfloat16), ((0, 0), (0, 0), (1, 1), (1, 1)))
    taps = [x_pad[:, :, dy:dy + h, dx:dx + w]          # each (N, Cin, H, W)
            for dy in range(3) for dx in range(3)]
    rows = [jnp.concatenate(taps, axis=1).reshape(n, 9 * cin, hw),
            jnp.ones((n, 1, hw), jnp.bfloat16)]        # ones row -> MXU bias
    if k_pad > k:
        rows.append(jnp.zeros((n, k_pad - k, hw), jnp.bfloat16))
    patches = jnp.concatenate(rows, axis=1)            # (N, K_pad, H*W)
    if hw_pad != hw:
        patches = jnp.pad(patches, ((0, 0), (0, 0), (0, hw_pad - hw)))

    # im2col-folded weights + bias column, zero-padded to K_pad:
    # w_full[o, (dy*3+dx)*Cin + c] = weight[o, c, dy, dx]; w_full[o, 9*Cin]=b[o]
    w_mat = jnp.transpose(weight, (0, 2, 3, 1)).reshape(cout, 9 * cin)
    w_full = jnp.concatenate(
        [w_mat, bias.astype(weight.dtype).reshape(cout, 1)], axis=1)
    w_full = jnp.pad(w_full.astype(jnp.bfloat16), ((0, 0), (0, k_pad - k)))

    out_flat = pl.pallas_call(
        _matmul_relu_kernel,
        out_shape=jax.ShapeDtypeStruct((n, cout, hw_pad), out_dtype),
        grid_spec=pltpu.PrefetchScalarGridSpec(
            num_scalar_prefetch=0,
            grid=(n, n_l),
            in_specs=[
                pl.BlockSpec((None, k_pad, tile), lambda i, j: (i, 0, j)),
                # TODO(synk): w_full is grid-invariant and ~4 KiB; single
                # buffering (pipeline_mode=pl.Buffered(1)) would save a tiny
                # re-DMA — left default double-buffered for portability.
                pl.BlockSpec((cout, k_pad), lambda i, j: (0, 0)),
            ],
            out_specs=pl.BlockSpec((None, cout, tile), lambda i, j: (i, 0, j)),
        ),
        compiler_params=pltpu.CompilerParams(
            dimension_semantics=("parallel", "parallel"),
            vmem_limit_bytes=vmem_limit),
    )(patches, w_full)

    # Drop padded tail; (N, Cout, H*W) -> (N, Cout, H, W) is metadata only.
    return out_flat[:, :, :hw].reshape(n, cout, h, w)


def conv3x3_bias_relu(x_nchw, weight_oihw, bias, out_dtype=jnp.float32):
    """ReLU(Conv2d(x, weight, bias, stride=1, padding=1)); NCHW in/out."""
    out_dt = jnp.dtype(out_dtype)
    tile_lanes, vmem_limit = _plan(x_nchw.shape, weight_oihw.shape[0],
                                   out_dt.itemsize)
    return _conv3x3_bias_relu_impl(x_nchw, weight_oihw, bias,
                                   tile_lanes, vmem_limit, out_dt)


class VGG16Pallas:
    """Mirror of pyFusion VGG16: forward returns [ReLU(conv1_1(x))]."""

    def __init__(self, key, out_dtype=jnp.float32):
        k_w, k_b = jax.random.split(key)
        # vgg16.features[0] = Conv2d(3, 64, kernel_size=3, padding=1).
        self.conv1_w = jax.random.normal(k_w, (64, 3, 3, 3), jnp.float32) * 0.05
        self.conv1_b = jax.random.normal(k_b, (64,), jnp.float32) * 0.05
        # f32 matches the PyTorch interface; pass jnp.bfloat16 to halve the
        # dominant HBM writeback if the consumer tolerates it.
        self.out_dtype = out_dtype

    def forward(self, x):
        feature_maps = []
        # idx 0: Conv2d(3,64,3,pad=1); idx 1: ReLU -> appended to feature_maps.
        fmap = conv3x3_bias_relu(x, self.conv1_w, self.conv1_b, self.out_dtype)
        feature_maps.append(fmap)
        return feature_maps


if __name__ == "__main__":
    key = jax.random.PRNGKey(0)
    k_model, k_x = jax.random.split(key)

    model = VGG16Pallas(k_model)
    # NCHW input, 3 channels as required by VGG16's first conv.
    x = jax.random.normal(k_x, (2, 3, 16, 16), jnp.float32)

    feature_maps = model.forward(x)
    out = jax.block_until_ready(feature_maps[0])

    assert out.shape == (2, 64, 16, 16), out.shape
    assert out.dtype == jnp.float32
    assert bool(jnp.all(out >= 0.0))  # ReLU output

    # Numerical check vs an XLA reference on the same bf16-rounded operands
    # (weights, bias and input are stored bf16; accumulation is f32).
    x_r = x.astype(jnp.bfloat16).astype(jnp.float32)
    w_r = model.conv1_w.astype(jnp.bfloat16).astype(jnp.float32)
    b_r = model.conv1_b.astype(jnp.bfloat16).astype(jnp.float32)
    ref = jax.lax.conv_general_dilated(
        x_r, w_r, window_strides=(1, 1), padding=((1, 1), (1, 1)),
        dimension_numbers=("NCHW", "OIHW", "NCHW"))
    ref = jnp.maximum(ref + b_r.reshape(1, -1, 1, 1), 0.0)
    assert bool(jnp.allclose(out, ref, atol=1e-2, rtol=1e-2)), (
        float(jnp.max(jnp.abs(out - ref))))

    print("KERNEL_OK")
</pallas_src>

<mosaic_0001>
module attributes {stable_mosaic.version = 11 : i64} {
  func.func @_matmul_relu_kernel(%arg0: i32, %arg1: i32, %arg2: memref<1x32x128xbf16, #tpu.memory_space<vmem>>, %arg3: memref<64x32xbf16, #tpu.memory_space<vmem>>, %arg4: memref<1x64x128xf32, #tpu.memory_space<vmem>>) attributes {dimension_semantics = [#tpu.dimension_semantics<parallel>, #tpu.dimension_semantics<parallel>], iteration_bounds = array<i64: 2, 2>, scalar_prefetch = 0 : i64, scratch_operands = 0 : i64, tpu.core_type = #tpu.core_type<tc>, window_params = [{transform_indices = @transform_0, window_bounds = array<i64: 1, 32, 128>}, {pipeline_mode = #tpu.pipeline_mode<synchronous>, transform_indices = @transform_1, window_bounds = array<i64: 64, 32>}, {transform_indices = @transform_2, window_bounds = array<i64: 1, 64, 128>}]} {
    %c0 = arith.constant 0 : index
    %c0_0 = arith.constant 0 : index
    %0 = vector.load %arg3[%c0, %c0_0] : memref<64x32xbf16, #tpu.memory_space<vmem>>, vector<64x32xbf16>
    %c0_1 = arith.constant 0 : index
    %c0_2 = arith.constant 0 : index
    %c0_3 = arith.constant 0 : index
    %1 = vector.load %arg2[%c0_1, %c0_2, %c0_3] : memref<1x32x128xbf16, #tpu.memory_space<vmem>>, vector<1x32x128xbf16>
    %2 = vector.shape_cast %1 : vector<1x32x128xbf16> to vector<32x128xbf16>
    %cst = arith.constant dense<0.000000e+00> : vector<64x128xf32>
    %3 = tpu.matmul %0, %2, %cst {dimension_numbers = #tpu.dot_dimension_numbers<[1], [0], [0], [1], [0, 0, 1, 1], [], []>} : vector<64x32xbf16>, vector<32x128xbf16>, vector<64x128xf32> -> vector<64x128xf32>
    %cst_4 = arith.constant 0.000000e+00 : f32
    %4 = vector.broadcast %cst_4 : f32 to vector<64x128xf32>
    %5 = arith.maximumf %3, %4 : vector<64x128xf32>
    %c0_5 = arith.constant 0 : index
    %c0_6 = arith.constant 0 : index
    %c0_7 = arith.constant 0 : index
    %6 = vector.load %arg4[%c0_5, %c0_6, %c0_7] : memref<1x64x128xf32, #tpu.memory_space<vmem>>, vector<1x64x128xf32>
    %7 = vector.shape_cast %6 : vector<1x64x128xf32> to vector<64x128xf32>
    %8 = vector.shape_cast %5 : vector<64x128xf32> to vector<1x64x128xf32>
    tpu.vector_store %arg4[%c0_5, %c0_6, %c0_7], %8 {strides = array<i32>} : memref<1x64x128xf32, #tpu.memory_space<vmem>>, vector<1x64x128xf32>,
    return
  }
  func.func @transform_0(%arg0: i32, %arg1: i32) -> (i32, i32, i32) {
    %c0_i32 = arith.constant 0 : i32
    %c0_i32_0 = arith.constant 0 : i32
    return %arg0, %c0_i32, %arg1 : i32, i32, i32
  }
  func.func @transform_1(%arg0: i32, %arg1: i32) -> (i32, i32) {
    %c0_i32 = arith.constant 0 : i32
    %c0_i32_0 = arith.constant 0 : i32
    %c0_i32_1 = arith.constant 0 : i32
    return %c0_i32, %c0_i32_0 : i32, i32
  }
  func.func @transform_2(%arg0: i32, %arg1: i32) -> (i32, i32, i32) {
    %c0_i32 = arith.constant 0 : i32
    %c0_i32_0 = arith.constant 0 : i32
    return %arg0, %c0_i32, %arg1 : i32, i32, i32
  }
}

</mosaic_0001>

<llo_original>
// kernel: _conv3x3_bias_relu_impl.1
$region0: #{_conv3x3_bias_relu_impl.1}
  #allocation0 [shape = 'u32[]', space=smem, size = 0x4, offset = 0x4, fixed_abs, tag = 'smem constant byte address 0x4 - core index']
  #allocation1 [shape = 'u32[144,128]{1,0:T(1,128)}', space=vmem, size = 0x12000, scoped, tag = 'internal scratch']
  %s0 = inlined_call_operand.vmem [shape: bf16[2,32,256], index: 0, kind: input, shape index: {}]
  %s1 = inlined_call_operand.vmem [shape: bf16[64,32], index: 1, kind: input, shape index: {}]
  %s2 = inlined_call_operand.vmem [shape: f32[2,64,256], index: 2, kind: output, shape index: {}]
  %s3 = sld [smem:[#allocation0]]
  $region116: #{_conv3x3_bias_relu_impl.1} parent=0
    _
  %s5 = ssub.s32 1, %s3
  %s6 = scalar_select 0, %s5, %s3
  $region1: #{_conv3x3_bias_relu_impl.1} parent=0
    #allocation2 [shape = 'u8[16384]{0}', space=vmem, size = 0x4000, scoped, tag = 'input window, operand 0']
    #allocation3 [shape = 'u8[65536]{0}', space=vmem, size = 0x10000, scoped, tag = 'output window, operand 0']
    loop: start=0, step=1, limit=6
    $region2: #{_conv3x3_bias_relu_impl.1} parent=1 // loop_pre_header
      _
    $region3: #{_conv3x3_bias_relu_impl.1} parent=1 // loop_header
      %s8 = sphi 0, %s12
      %p9 = scmp.ge.s32.totalorder %s8, 6
      %s15 = sphi 0, %s27
      %s16 = sphi 0, %s23
      %s17 = sphi 0, %s15
      %s18 = sphi 0, %s16
      %s19 = sphi 0, %s17
      %s20 = sphi 0, %s18
      %s32 = sphi 0, %s34
      %s35 = sphi 0, %s32
      %s36 = sphi 0, %s35
      %s52 = sphi 0, %s36
      %s56 = sphi 0, %s56
      %s58 = sphi 0, %s56
      %s59 = sphi 0, %s58
      %s73 = sphi 0, %s59
      %s81 = sphi 0, %s83
      %s84 = sphi 0, %s81
      %s85 = sphi 0, %s84
      %s101 = sphi 0, %s85
    $region4: #{_conv3x3_bias_relu_impl.1} parent=1 // loop_header_branch
      %11 = sbr.rel (%p9) target = $region8
    $region5: #{_conv3x3_bias_relu_impl.1} parent=1 // loop_body
      %s13 = ssub.s32 %s8, 1
      %s14 = ssub.s32 %s8, 2
      %s21 = sadd.s32 1, %s16
      %p22 = scmp.ge.s32.totalorder %s21, 2
      %s23 = scalar_select %p22, 0, %s21
      %s24 = sadd.s32 1, %s15
      %s25 = scalar_select %p22, %s24, %s15
      %p26 = scmp.ge.s32.totalorder %s25, 2
      %s27 = scalar_select %p26, 0, %s25
      %s28 = ssub.s32 %s15, %s27
      %s29 = ssub.s32 %s16, %s23
      %s30 = sor.u32 %s28, %s29
      %p31 = scmp.eq.s32.totalorder %s30, 0
      %s33 = sadd.s32 %s32, 1
      %s34 = scalar_select %p31, %s32, %s33
      %p37 = pneg %p31
      %p38 = scmp.eq.s32.totalorder %s8, 3
      %p39 = por %p37, %p38
      %p40 = scmp.ne.s32.totalorder %s32, %s35
      %p41 = scmp.eq.s32.totalorder %s8, 0
      %p42 = por %p40, %p41
      %p43 = scmp.ne.s32.totalorder %s32, %s35
      %p44 = scmp.eq.s32.totalorder %s13, 3
      %p45 = por %p43, %p44
      %p46 = scmp.ne.s32.totalorder %s35, %s36
      %p47 = scmp.eq.s32.totalorder %s13, 0
      %p48 = por %p46, %p47
      %p49 = scmp.ne.s32.totalorder %s35, %s36
      %p50 = scmp.eq.s32.totalorder %s14, 3
      %p51 = por %p49, %p50
      %p53 = scmp.ne.s32.totalorder %s36, %s52
      %p54 = scmp.eq.s32.totalorder %s14, 0
      %p55 = por %p53, %p54
      %s57 = sadd.s32 %s56, 1
      %p60 = scmp.eq.s32.totalorder %s8, 3
      %p61 = scmp.ne.s32.totalorder %s56, %s58
      %p62 = scmp.eq.s32.totalorder %s8, 0
      %p63 = por %p61, %p62
      %p64 = scmp.ne.s32.totalorder %s56, %s58
      %p65 = scmp.eq.s32.totalorder %s13, 3
      %p66 = por %p64, %p65
      %p67 = scmp.ne.s32.totalorder %s58, %s59
      %p68 = scmp.eq.s32.totalorder %s13, 0
      %p69 = por %p67, %p68
      %p70 = scmp.ne.s32.totalorder %s58, %s59
      %p71 = scmp.eq.s32.totalorder %s14, 3
      %p72 = por %p70, %p71
      %p74 = scmp.ne.s32.totalorder %s59, %s73
      %p75 = scmp.eq.s32.totalorder %s14, 0
      %p76 = por %p74, %p75
      %s77 = ssub.s32 %s15, %s27
      %s78 = ssub.s32 %s16, %s23
      %s79 = sor.u32 %s77, %s78
      %p80 = scmp.eq.s32.totalorder %s79, 0
      %s82 = sadd.s32 %s81, 1
      %s83 = scalar_select %p80, %s81, %s82
      %p86 = pneg %p80
      %p87 = scmp.eq.s32.totalorder %s8, 3
      %p88 = por %p86, %p87
      %p89 = scmp.ne.s32.totalorder %s81, %s84
      %p90 = scmp.eq.s32.totalorder %s8, 0
      %p91 = por %p89, %p90
      %p92 = scmp.ne.s32.totalorder %s81, %s84
      %p93 = scmp.eq.s32.totalorder %s13, 3
      %p94 = por %p92, %p93
      %p95 = scmp.ne.s32.totalorder %s84, %s85
      %p96 = scmp.eq.s32.totalorder %s13, 0
      %p97 = por %p95, %p96
      %p98 = scmp.ne.s32.totalorder %s84, %s85
      %p99 = scmp.eq.s32.totalorder %s14, 3
      %p100 = por %p98, %p99
      %p102 = scmp.ne.s32.totalorder %s85, %s101
      %p103 = scmp.eq.s32.totalorder %s14, 0
      %p104 = por %p102, %p103
      %p105 = scmp.le.s32.totalorder 1, %s8
      %p106 = scmp.lt.s32.totalorder %s8, 5
      %p107 = pnand %p105, %p106
      %p108 = pneg %p107
      // Predicated region
      $region9: #{_conv3x3_bias_relu_impl.1} parent=5 // pred_check
        _
      $region10: #{_conv3x3_bias_relu_impl.1} parent=5 // pred_check_branch
        %110 = sbr.rel (%p107) target = $region12
      $region11: #{_conv3x3_bias_relu_impl.1} parent=5 // pred_region
        %s111 = ssub.s32 %s8, 1
        // Predicated region
        $region13: #{_conv3x3_bias_relu_impl.1} parent=11 // pred_check
          %p112 = pneg %p69
        $region14: #{_conv3x3_bias_relu_impl.1} parent=11 // pred_check_branch
          %114 = sbr.rel (%p112) target = $region16
        $region15: #{_conv3x3_bias_relu_impl.1} parent=11 // pred_region
          _
        $region16: #{_conv3x3_bias_relu_impl.1} parent=11 // pred_fallthru
          _
      $region12: #{_conv3x3_bias_relu_impl.1} parent=5 // pred_fallthru
        _
      %p115 = scmp.lt.s32.totalorder %s8, 4
      // Predicated region
      $region17: #{_conv3x3_bias_relu_impl.1} parent=5 // pred_check
        %p116 = pneg %p115
      $region18: #{_conv3x3_bias_relu_impl.1} parent=5 // pred_check_branch
        %118 = sbr.rel (%p116) target = $region20
      $region19: #{_conv3x3_bias_relu_impl.1} parent=5 // pred_region
        // Predicated region
        $region21: #{_conv3x3_bias_relu_impl.1} parent=19 // pred_check
          %p119 = pneg %p42
        $region22: #{_conv3x3_bias_relu_impl.1} parent=19 // pred_check_branch
          %121 = sbr.rel (%p119) target = $region24
        $region23: #{_conv3x3_bias_relu_impl.1} parent=19 // pred_region
          %s122 = sand.u32 %s32, 1
          %s123 = sand.u32 %s32, 1
          %s124 = smul.addr %s123, 16
          %s125 = scalar_lea.vmem [#allocation2], %s124
          %s126 = smul.addr %s15, 8
          %s127 = sadd.s32 %s16, %s126
          %s128 = smul.addr %s127, 4
          %s129 = scalar_lea.vmem %s0, %s128
          // Predicated region
          $region25: #{_conv3x3_bias_relu_impl.1} parent=23 // pred_check
            _
          $region26: #{_conv3x3_bias_relu_impl.1} parent=23 // pred_check_branch
            %131 = sbr.rel (0) target = $region28
          $region27: #{_conv3x3_bias_relu_impl.1} parent=23 // pred_region
            // Predicated region
            $region29: #{_conv3x3_bias_relu_impl.1} parent=27 // pred_check
              _
            $region30: #{_conv3x3_bias_relu_impl.1} parent=27 // pred_check_branch
              %133 = sbr.rel target = $region32
            $region31: #{_conv3x3_bias_relu_impl.1} parent=27 // pred_region
              // Predicated region
              $region44: #{_conv3x3_bias_relu_impl.1} parent=31 // pred_check
                _
              $region45: #{_conv3x3_bias_relu_impl.1} parent=31 // pred_check_branch
                %155 = sbr.rel (0) target = $region47
              $region46: #{_conv3x3_bias_relu_impl.1} parent=31 // pred_region
                loop: start=0, step=1, limit=1
                $region48: #{_conv3x3_bias_relu_impl.1} parent=46 // loop_pre_header
                  _
                $region49: #{_conv3x3_bias_relu_impl.1} parent=46 // loop_header
                  %s157 = sphi 0, %s161
                  %p158 = scmp.ge.s32.totalorder %s157, 1
                  %s162 = sphi %s129, %s129
                  %s163 = sphi %s125, %s125
                $region50: #{_conv3x3_bias_relu_impl.1} parent=46 // loop_header_branch
                  %160 = sbr.rel (%p158) target = $region54
                $region51: #{_conv3x3_bias_relu_impl.1} parent=46 // loop_body
                  _
                $region52: #{_conv3x3_bias_relu_impl.1} parent=46 // loop_footer
                  %s161 = sadd.s32 1, %s157
                $region53: #{_conv3x3_bias_relu_impl.1} parent=46 // loop_footer_branch
                  %156 = sbr.rel target = $region49
                $region54: #{_conv3x3_bias_relu_impl.1} parent=46 // loop_exit
                  _
                %s165 = ssub.s32 16, 1
                loop: start=0, step=1, limit=1
                $region55: #{_conv3x3_bias_relu_impl.1} parent=46 // loop_pre_header
                  _
                $region56: #{_conv3x3_bias_relu_impl.1} parent=46 // loop_header
                  %s167 = sphi 0, %s171
                  %p168 = scmp.ge.s32.totalorder %s167, 1
                  %s172 = sphi %s129, %s129
                  %s173 = sphi %s125, %s125
                $region57: #{_conv3x3_bias_relu_impl.1} parent=46 // loop_header_branch
                  %170 = sbr.rel (%p168) target = $region61
                $region58: #{_conv3x3_bias_relu_impl.1} parent=46 // loop_body
                  %v174 = vld [vmem:[%s172] sm:%s165]
                  %175 = vst [vmem:[%s173] sm:%s165] %v174
                  %v176 = vld [vmem:[%s172 + $0x8] sm:%s165]
                  %177 = vst [vmem:[%s173 + $0x4] sm:%s165] %v176
                  %v178 = vld [vmem:[%s172 + $0x10] sm:%s165]
                  %179 = vst [vmem:[%s173 + $0x8] sm:%s165] %v178
                  %v180 = vld [vmem:[%s172 + $0x18] sm:%s165]
                  %181 = vst [vmem:[%s173 + $0xc] sm:%s165] %v180
                $region59: #{_conv3x3_bias_relu_impl.1} parent=46 // loop_footer
                  %s171 = sadd.s32 1, %s167
                $region60: #{_conv3x3_bias_relu_impl.1} parent=46 // loop_footer_branch
                  %166 = sbr.rel target = $region56
                $region61: #{_conv3x3_bias_relu_impl.1} parent=46 // loop_exit
                  _
              $region47: #{_conv3x3_bias_relu_impl.1} parent=31 // pred_fallthru
                _
            $region32: #{_conv3x3_bias_relu_impl.1} parent=27 // pred_fallthru
              _
            // Predicated region
            $region33: #{_conv3x3_bias_relu_impl.1} parent=27 // pred_check
              _
            $region34: #{_conv3x3_bias_relu_impl.1} parent=27 // pred_check_branch
              %135 = sbr.rel (0) target = $region36
            $region35: #{_conv3x3_bias_relu_impl.1} parent=27 // pred_region
              %s137 = ssub.s32 16, 1
              loop: start=0, step=1, limit=1
              $region37: #{_conv3x3_bias_relu_impl.1} parent=35 // loop_pre_header
                _
              $region38: #{_conv3x3_bias_relu_impl.1} parent=35 // loop_header
                %s139 = sphi 0, %s143
                %p140 = scmp.ge.s32.totalorder %s139, 1
                %s144 = sphi %s129, %s129
                %s145 = sphi %s125, %s125
              $region39: #{_conv3x3_bias_relu_impl.1} parent=35 // loop_header_branch
                %142 = sbr.rel (%p140) target = $region43
              $region40: #{_conv3x3_bias_relu_impl.1} parent=35 // loop_body
                %v146 = vld [vmem:[%s144] sm:%s137]
                %147 = vst [vmem:[%s145] sm:%s137] %v146
                %v148 = vld [vmem:[%s144 + $0x8] sm:%s137]
                %149 = vst [vmem:[%s145 + $0x4] sm:%s137] %v148
                %v150 = vld [vmem:[%s144 + $0x10] sm:%s137]
                %151 = vst [vmem:[%s145 + $0x8] sm:%s137] %v150
                %v152 = vld [vmem:[%s144 + $0x18] sm:%s137]
                %153 = vst [vmem:[%s145 + $0xc] sm:%s137] %v152
              $region41: #{_conv3x3_bias_relu_impl.1} parent=35 // loop_footer
                %s143 = sadd.s32 1, %s139
              $region42: #{_conv3x3_bias_relu_impl.1} parent=35 // loop_footer_branch
                %138 = sbr.rel target = $region38
              $region43: #{_conv3x3_bias_relu_impl.1} parent=35 // loop_exit
                _
            $region36: #{_conv3x3_bias_relu_impl.1} parent=27 // pred_fallthru
              _
          $region28: #{_conv3x3_bias_relu_impl.1} parent=23 // pred_fallthru
            _
          %182 = vnop
        $region24: #{_conv3x3_bias_relu_impl.1} parent=19 // pred_fallthru
          _
      $region20: #{_conv3x3_bias_relu_impl.1} parent=5 // pred_fallthru
        _
      %p183 = scmp.le.s32.totalorder 1, %s8
      %p184 = scmp.lt.s32.totalorder %s8, 5
      %p185 = pnand %p183, %p184
      %p186 = pneg %p185
      // Predicated region
      $region62: #{_conv3x3_bias_relu_impl.1} parent=5 // pred_check
        _
      $region63: #{_conv3x3_bias_relu_impl.1} parent=5 // pred_check_branch
        %188 = sbr.rel (%p185) target = $region65
      $region64: #{_conv3x3_bias_relu_impl.1} parent=5 // pred_region
        %s189 = ssub.s32 %s8, 1
        %s190 = sand.u32 %s35, 1
        %s191 = sand.u32 %s35, 1
        %s192 = smul.addr %s191, 16
        %s193 = scalar_lea.vmem [#allocation2], %s192
        // Predicated region
        $region66: #{_conv3x3_bias_relu_impl.1} parent=64 // pred_check
          %p194 = pneg %p48
        $region67: #{_conv3x3_bias_relu_impl.1} parent=64 // pred_check_branch
          %196 = sbr.rel (%p194) target = $region69
        $region68: #{_conv3x3_bias_relu_impl.1} parent=64 // pred_region
          _
        $region69: #{_conv3x3_bias_relu_impl.1} parent=64 // pred_fallthru
          _
        %s197 = sand.u32 %s35, 1
        %s198 = sand.u32 %s35, 1
        %s199 = smul.addr %s198, 16
        %s200 = scalar_lea.vmem [#allocation2], %s199
        %p201 = pneg %p48
        %p202 = pneg %p45
        %p203 = pneg %p69
        %p204 = pneg %p66
        %p205 = pneg %p97
        %p206 = pneg %p94
        %s207 = sand.u32 %s84, 1
        %s208 = sand.u32 %s84, 1
        %s209 = smul.addr %s208, 64
        %s210 = scalar_lea.vmem [#allocation3], %s209
        %v212 = vld [vmem:[%s1] sm:$0xf]
        %v213 = vld [vmem:[%s1 + $0x4] sm:$0xf]
        %v214 = vld [vmem:[%s1 + $0x8] sm:$0xf]
        %v215 = vld [vmem:[%s1 + $0xc] sm:$0xf]
        %v216 = vld [vmem:[%s1 + $0x10] sm:$0xf]
        %v217 = vld [vmem:[%s1 + $0x14] sm:$0xf]
        %v218 = vld [vmem:[%s1 + $0x18] sm:$0xf]
        %v219 = vld [vmem:[%s1 + $0x1c] sm:$0xf]
        %v220 = vld [vmem:[%s193] sm:$0xf]
        %v221 = vld [vmem:[%s193 + $0x4] sm:$0xf]
        %v222 = vld [vmem:[%s193 + $0x8] sm:$0xf]
        %v223 = vld [vmem:[%s193 + $0xc] sm:$0xf]
        %v232 = vunpack.c.l.b16 %v212
        %v233 = vunpack.c.l.b16 %v213
        %v234 = vunpack.c.l.b16 %v214
        %v235 = vunpack.c.l.b16 %v215
        %v236 = vunpack.c.l.b16 %v216
        %v237 = vunpack.c.l.b16 %v217
        %v238 = vunpack.c.l.b16 %v218
        %v239 = vunpack.c.l.b16 %v219
        %v240 = vpack.c.b16 %v233, %v232
        %v241 = vpack.c.b16 %v235, %v234
        %v242 = vpack.c.b16 %v237, %v236
        %v243 = vpack.c.b16 %v239, %v238
        %v248 = vunpack.c.l.b16 %v220
        %v249 = vunpack.c.l.b16 %v221
        %v250 = vunpack.c.l.b16 %v222
        %v251 = vunpack.c.l.b16 %v223
        %v252 = vpack.c.b16 %v249, %v248
        %v253 = vpack.c.b16 %v251, %v250
        %vm256 = vcmask 261120
        %v258 = vsel %vm256, %v240, 0
        %v261 = vsel %vm256, %v241, 0
        %v264 = vsel %vm256, %v242, 0
        %v267 = vsel %vm256, %v243, 0
        %269 = vmatprep.subr.bf16.mxu0 0
        %270 = vmatpush1.bf16.msra.mxu0 0
        %271 = vmatprep.subr.bf16.mxu0 0
        %272 = vmatpush1.bf16.msra.mxu0 0
        %273 = vmatprep.subr.bf16.mxu0 0
        %274 = vmatpush1.bf16.msra.mxu0 0
        %275 = vmatprep.subr.bf16.mxu0 0
        %276 = vmatpush1.bf16.msra.mxu0 0
        %277 = vmatprep.subr.bf16.mxu0 0
        %278 = vmatpush1.bf16.msra.mxu0 0
        %279 = vmatprep.subr.bf16.mxu0 0
        %280 = vmatpush1.bf16.msra.mxu0 0
        %281 = vmatprep.subr.bf16.mxu0 0
        %282 = vmatpush1.bf16.msra.mxu0 %v253
        %283 = vmatprep.subr.bf16.mxu0 0
        %284 = vmatpush1.bf16.msra.mxu0 %v252
        %285 = vmatprep.subr.bf16.mxu0 0
        %286 = vmatpush2.bf16.msra.mxu0 0
        %287 = vmatprep.subr.bf16.mxu0 0
        %288 = vmatpush2.bf16.msra.mxu0 0
        %289 = vmatprep.subr.bf16.mxu0 0
        %290 = vmatpush2.bf16.msra.mxu0 0
        %291 = vmatprep.subr.bf16.mxu0 0
        %292 = vmatpush2.bf16.msra.mxu0 0
        %293 = vmatprep.subr.bf16.mxu0 0
        %294 = vmatpush2.bf16.msra.mxu0 0
        %295 = vmatprep.subr.bf16.mxu0 0
        %296 = vmatpush2.bf16.msra.mxu0 0
        %297 = vmatprep.subr.bf16.mxu0 0
        %298 = vmatpush2.bf16.msra.mxu0 0
        %299 = vmatprep.subr.bf16.mxu0 0
        %300 = vmatpush2.bf16.msra.mxu0 0
        %301 = vmatprep.mubr.bf16.mxu0 0
        %302 = vmatmul.mubr.bf16.gmra.mxu0 %v258
        %v303 = vpop.f32.mrf.mxu0
        %v304 = vadd.f32 0.0, %v303
        %v305 = vpop.f32.mrf.mxu0
        %v306 = vpop.f32.mrf.mxu0
        %v307 = vadd.f32 0.0, %v306
        %v308 = vpop.f32.mrf.mxu0
        %309 = vmatprep.mubr.bf16.mxu0 0
        %310 = vmatmul.mubr.bf16.gmra.mxu0 %v261
        %v311 = vpop.f32.mrf.mxu0
        %v312 = vadd.f32 0.0, %v311
        %v313 = vpop.f32.mrf.mxu0
        %v314 = vpop.f32.mrf.mxu0
        %v315 = vadd.f32 0.0, %v314
        %v316 = vpop.f32.mrf.mxu0
        %317 = vmatprep.mubr.bf16.mxu0 0
        %318 = vmatmul.mubr.bf16.gmra.mxu0 %v264
        %v319 = vpop.f32.mrf.mxu0
        %v320 = vadd.f32 0.0, %v319
        %v321 = vpop.f32.mrf.mxu0
        %v322 = vpop.f32.mrf.mxu0
        %v323 = vadd.f32 0.0, %v322
        %v324 = vpop.f32.mrf.mxu0
        %325 = vmatprep.mubr.bf16.mxu0 0
        %326 = vmatmul.mubr.bf16.gmra.mxu0 %v267
        %v327 = vpop.f32.mrf.mxu0
        %v328 = vadd.f32 0.0, %v327
        %v329 = vpop.f32.mrf.mxu0
        %v330 = vpop.f32.mrf.mxu0
        %v331 = vadd.f32 0.0, %v330
        %v332 = vpop.f32.mrf.mxu0
        %333 = vdwg.mxu0
        %v334 = vmax.f32 %v304, 0.0
        %v335 = vmax.f32 %v307, 0.0
        %v336 = vmax.f32 %v312, 0.0
        %v337 = vmax.f32 %v315, 0.0
        %v338 = vmax.f32 %v320, 0.0
        %v339 = vmax.f32 %v323, 0.0
        %v340 = vmax.f32 %v328, 0.0
        %v341 = vmax.f32 %v331, 0.0
        %342 = vst [vmem:[%s210] sm:$0xff] %v334
        %343 = vst [vmem:[%s210 + $0x8] sm:$0xff] %v335
        %344 = vst [vmem:[%s210 + $0x10] sm:$0xff] %v336
        %345 = vst [vmem:[%s210 + $0x18] sm:$0xff] %v337
        %346 = vst [vmem:[%s210 + $0x20] sm:$0xff] %v338
        %347 = vst [vmem:[%s210 + $0x28] sm:$0xff] %v339
        %348 = vst [vmem:[%s210 + $0x30] sm:$0xff] %v340
        %349 = vst [vmem:[%s210 + $0x38] sm:$0xff] %v341
        %s350 = sand.u32 %s84, 1
        %s351 = sand.u32 %s84, 1
        %s352 = smul.addr %s351, 64
        %s353 = scalar_lea.vmem [#allocation3], %s352
        // Predicated region
        $region70: #{_conv3x3_bias_relu_impl.1} parent=64 // pred_check
          %p354 = pneg %p94
        $region71: #{_conv3x3_bias_relu_impl.1} parent=64 // pred_check_branch
          %356 = sbr.rel (%p354) target = $region73
        $region72: #{_conv3x3_bias_relu_impl.1} parent=64 // pred_region
          %s357 = smul.addr %s17, 16
          %s358 = sadd.s32 %s18, %s357
          %s359 = smul.addr %s358, 8
          %s360 = scalar_lea.vmem %s2, %s359
          // Predicated region
          $region74: #{_conv3x3_bias_relu_impl.1} parent=72 // pred_check
            _
          $region75: #{_conv3x3_bias_relu_impl.1} parent=72 // pred_check_branch
            %362 = sbr.rel (0) target = $region77
          $region76: #{_conv3x3_bias_relu_impl.1} parent=72 // pred_region
            // Predicated region
            $region78: #{_conv3x3_bias_relu_impl.1} parent=76 // pred_check
              _
            $region79: #{_conv3x3_bias_relu_impl.1} parent=76 // pred_check_branch
              %364 = sbr.rel (0) target = $region81
            $region80: #{_conv3x3_bias_relu_impl.1} parent=76 // pred_region
              // Predicated region
              $region93: #{_conv3x3_bias_relu_impl.1} parent=80 // pred_check
                _
              $region94: #{_conv3x3_bias_relu_impl.1} parent=80 // pred_check_branch
                %394 = sbr.rel (0) target = $region96
              $region95: #{_conv3x3_bias_relu_impl.1} parent=80 // pred_region
                loop: start=0, step=1, limit=1
                $region97: #{_conv3x3_bias_relu_impl.1} parent=95 // loop_pre_header
                  _
                $region98: #{_conv3x3_bias_relu_impl.1} parent=95 // loop_header
                  %s396 = sphi 0, %s400
                  %p397 = scmp.ge.s32.totalorder %s396, 1
                  %s401 = sphi %s353, %s353
                  %s402 = sphi %s360, %s360
                $region99: #{_conv3x3_bias_relu_impl.1} parent=95 // loop_header_branch
                  %399 = sbr.rel (%p397) target = $region103
                $region100: #{_conv3x3_bias_relu_impl.1} parent=95 // loop_body
                  %v403 = vld [vmem:[%s401] sm:$0xff]
                  %404 = vst [vmem:[%s402] sm:$0xff] %v403
                  %v405 = vld [vmem:[%s401 + $0x8] sm:$0xff]
                  %406 = vst [vmem:[%s402 + $0x10] sm:$0xff] %v405
                  %v407 = vld [vmem:[%s401 + $0x10] sm:$0xff]
                  %408 = vst [vmem:[%s402 + $0x20] sm:$0xff] %v407
                  %v409 = vld [vmem:[%s401 + $0x18] sm:$0xff]
                  %410 = vst [vmem:[%s402 + $0x30] sm:$0xff] %v409
                  %v411 = vld [vmem:[%s401 + $0x20] sm:$0xff]
                  %412 = vst [vmem:[%s402 + $0x40] sm:$0xff] %v411
                  %v413 = vld [vmem:[%s401 + $0x28] sm:$0xff]
                  %414 = vst [vmem:[%s402 + $0x50] sm:$0xff] %v413
                  %v415 = vld [vmem:[%s401 + $0x30] sm:$0xff]
                  %416 = vst [vmem:[%s402 + $0x60] sm:$0xff] %v415
                  %v417 = vld [vmem:[%s401 + $0x38] sm:$0xff]
                  %418 = vst [vmem:[%s402 + $0x70] sm:$0xff] %v417
                $region101: #{_conv3x3_bias_relu_impl.1} parent=95 // loop_footer
                  %s400 = sadd.s32 1, %s396
                $region102: #{_conv3x3_bias_relu_impl.1} parent=95 // loop_footer_branch
                  %395 = sbr.rel target = $region98
                $region103: #{_conv3x3_bias_relu_impl.1} parent=95 // loop_exit
                  _
              $region96: #{_conv3x3_bias_relu_impl.1} parent=80 // pred_fallthru
                _
              // Predicated region
              $region104: #{_conv3x3_bias_relu_impl.1} parent=80 // pred_check
                _
              $region105: #{_conv3x3_bias_relu_impl.1} parent=80 // pred_check_branch
                %420 = sbr.rel target = $region107
              $region106: #{_conv3x3_bias_relu_impl.1} parent=80 // pred_region
                _
              $region107: #{_conv3x3_bias_relu_impl.1} parent=80 // pred_fallthru
                _
            $region81: #{_conv3x3_bias_relu_impl.1} parent=76 // pred_fallthru
              _
            // Predicated region
            $region82: #{_conv3x3_bias_relu_impl.1} parent=76 // pred_check
              _
            $region83: #{_conv3x3_bias_relu_impl.1} parent=76 // pred_check_branch
              %366 = sbr.rel target = $region85
            $region84: #{_conv3x3_bias_relu_impl.1} parent=76 // pred_region
              %s368 = ssub.s32 256, 1
              loop: start=0, step=1, limit=1
              $region86: #{_conv3x3_bias_relu_impl.1} parent=84 // loop_pre_header
                _
              $region87: #{_conv3x3_bias_relu_impl.1} parent=84 // loop_header
                %s370 = sphi 0, %s374
                %p371 = scmp.ge.s32.totalorder %s370, 1
                %s375 = sphi %s353, %s353
                %s376 = sphi %s360, %s360
              $region88: #{_conv3x3_bias_relu_impl.1} parent=84 // loop_header_branch
                %373 = sbr.rel (%p371) target = $region92
              $region89: #{_conv3x3_bias_relu_impl.1} parent=84 // loop_body
                %v377 = vld [vmem:[%s375] sm:%s368]
                %378 = vst [vmem:[%s376] sm:%s368] %v377
                %v379 = vld [vmem:[%s375 + $0x8] sm:%s368]
                %380 = vst [vmem:[%s376 + $0x10] sm:%s368] %v379
                %v381 = vld [vmem:[%s375 + $0x10] sm:%s368]
                %382 = vst [vmem:[%s376 + $0x20] sm:%s368] %v381
                %v383 = vld [vmem:[%s375 + $0x18] sm:%s368]
                %384 = vst [vmem:[%s376 + $0x30] sm:%s368] %v383
                %v385 = vld [vmem:[%s375 + $0x20] sm:%s368]
                %386 = vst [vmem:[%s376 + $0x40] sm:%s368] %v385
                %v387 = vld [vmem:[%s375 + $0x28] sm:%s368]
                %388 = vst [vmem:[%s376 + $0x50] sm:%s368] %v387
                %v389 = vld [vmem:[%s375 + $0x30] sm:%s368]
                %390 = vst [vmem:[%s376 + $0x60] sm:%s368] %v389
                %v391 = vld [vmem:[%s375 + $0x38] sm:%s368]
                %392 = vst [vmem:[%s376 + $0x70] sm:%s368] %v391
              $region90: #{_conv3x3_bias_relu_impl.1} parent=84 // loop_footer
                %s374 = sadd.s32 1, %s370
              $region91: #{_conv3x3_bias_relu_impl.1} parent=84 // loop_footer_branch
                %369 = sbr.rel target = $region87
              $region92: #{_conv3x3_bias_relu_impl.1} parent=84 // loop_exit
                _
            $region85: #{_conv3x3_bias_relu_impl.1} parent=76 // pred_fallthru
              _
          $region77: #{_conv3x3_bias_relu_impl.1} parent=72 // pred_fallthru
            _
          %421 = vnop
        $region73: #{_conv3x3_bias_relu_impl.1} parent=64 // pred_fallthru
          _
      $region65: #{_conv3x3_bias_relu_impl.1} parent=5 // pred_fallthru
        _
      %p422 = scmp.le.s32.totalorder 2, %s8
      // Predicated region
      $region108: #{_conv3x3_bias_relu_impl.1} parent=5 // pred_check
        %p423 = pneg %p422
      $region109: #{_conv3x3_bias_relu_impl.1} parent=5 // pred_check_branch
        %425 = sbr.rel (%p423) target = $region111
      $region110: #{_conv3x3_bias_relu_impl.1} parent=5 // pred_region
        %s426 = ssub.s32 %s8, 2
        // Predicated region
        $region112: #{_conv3x3_bias_relu_impl.1} parent=110 // pred_check
          %p427 = pneg %p100
        $region113: #{_conv3x3_bias_relu_impl.1} parent=110 // pred_check_branch
          %429 = sbr.rel (%p427) target = $region115
        $region114: #{_conv3x3_bias_relu_impl.1} parent=110 // pred_region
          %s430 = sand.u32 %s85, 1
          %s431 = sand.u32 %s85, 1
          %s432 = smul.addr %s431, 64
          %s433 = scalar_lea.vmem [#allocation3], %s432
        $region115: #{_conv3x3_bias_relu_impl.1} parent=110 // pred_fallthru
          _
      $region111: #{_conv3x3_bias_relu_impl.1} parent=5 // pred_fallthru
        _
    $region6: #{_conv3x3_bias_relu_impl.1} parent=1 // loop_footer
      %s12 = sadd.s32 1, %s8
    $region7: #{_conv3x3_bias_relu_impl.1} parent=1 // loop_footer_branch
      %7 = sbr.rel target = $region3
    $region8: #{_conv3x3_bias_relu_impl.1} parent=1 // loop_exit
      _

</llo_original>
